<compile_context>
chip_gen: v5e
topology: v5e:2x2
jax: 0.10.0
libtpu: 0.0.40
codegen_flags: <defaults>
</compile_context>

<pallas_src>
import jax
import jax.numpy as jnp
from jax import lax
from jax.experimental import pallas as pl
from jax.experimental.pallas import tpu as pltpu


def _make_matvec_kernel(d_total, tk, mask_k_tail):
    """Kernel: y[i-tile] = sum_k X[i-tile, k-tile] * w[k-tile] + bias.

    Grid is (row_tiles, k_tiles); the y block index ignores k, so the (tm, 1)
    output block stays resident in VMEM across the reduction axis and is used
    directly as the accumulator (no scratch needed).
    """

    def kernel(bias_ref, x_ref, w_ref, y_ref):
        k = pl.program_id(1)

        @pl.when(k == 0)
        def _init():
            # Initialize the resident output block with the scalar bias.
            y_ref[...] = jnp.zeros_like(y_ref) + bias_ref[0, 0]

        # VPU multiply (w broadcast across sublanes) + lane reduce on the XLU.
        x = x_ref[...].astype(jnp.float32)          # (tm, tk)
        w = w_ref[...].astype(jnp.float32)          # (1, tk)
        prod = x * w
        if mask_k_tail:
            # Ragged last K tile: zero out-of-range columns (garbage X/w lanes).
            col = k * tk + lax.broadcasted_iota(jnp.int32, prod.shape, 1)
            prod = jnp.where(col < d_total, prod, 0.0)
        y_ref[...] += jnp.sum(prod, axis=1, keepdims=True)   # (tm, 1)

    return kernel


def _vmem_capacity_bytes():
    """Physical VMEM capacity of the local TPU; conservative fallback."""
    try:
        info = pltpu.get_tpu_info()
        cap = getattr(info, "vmem_capacity_bytes", None)
        if cap:
            return int(cap)
    except Exception:
        pass
    return 64 * 1024 * 1024  # v7x per-TC VMEM (smallest of v5e/v6e/v7x)


def _choose_tiles(n_rows, dim, itemsize, vmem_cap):
    """Pick (tm, tk): row tile and reduction tile.

    X-tile byte target is generation-aware: ~12 MiB on 64 MiB-VMEM parts
    (v7x, double-buffered ~24-26 MiB), ~40 MiB on 128 MiB parts (v5e/v6e).
    tm is capped at 8192 because the (tm, 1) y block lane-pads to tm*512 B
    in VMEM (double-buffered).
    """
    x_tile_budget = (12 << 20) if vmem_cap <= (96 << 20) else (40 << 20)
    row_bytes = dim * itemsize

    if 128 * row_bytes <= x_tile_budget:
        # Common case: full-D rows per tile, no K split.
        tk = dim
        tm = (x_tile_budget // row_bytes) // 128 * 128
        tm = max(128, min(tm, 8192))
    else:
        # Very large D: K-split with an innermost reduction grid axis.
        tm = 128
        tk = (x_tile_budget // (tm * itemsize)) // 128 * 128
        tk = max(128, tk)

    if n_rows <= 128:
        # Tiny problem: one exact (sublane-aligned) block.
        tm = max(8, ((n_rows + 7) // 8) * 8)
    elif n_rows <= tm:
        # Would be a single row tile: split into two so the "parallel" row
        # axis can use both TensorCores on v7x (harmless elsewhere).
        half = -(-n_rows // 2)
        tm = max(128, ((half + 127) // 128) * 128)

    return tm, tk


def pytorch_lasso_forward(X, w, bias, log_z):
    """Forward pass of PytorchLasso: (X @ w + bias, exp(log_z)).

    X: (N, dim), w: (dim,), bias: scalar or (1,), log_z: (dim,)
    returns (y: (N,) float32, z: (dim,) float32)
    """
    N, D = X.shape
    itemsize = jnp.dtype(X.dtype).itemsize

    vmem_cap = _vmem_capacity_bytes()
    tm, tk = _choose_tiles(N, D, itemsize, vmem_cap)
    num_row_tiles = pl.cdiv(N, tm)
    num_k = pl.cdiv(D, tk)
    mask_k_tail = (D % tk) != 0

    # w stays f32 (tiny; keeps the multiply f32-exact even for bf16 X).
    w2 = w.reshape(1, D).astype(jnp.float32)
    bias2 = jnp.asarray(bias, jnp.float32).reshape(1, 1)

    # VMEM accounting: double-buffered X tile, w row (sublane-padded to 8 rows,
    # double-buffered), y column block (lane-padded to 128, double-buffered),
    # plus internal-scratch headroom; clamped to 0.85 x physical capacity.
    vmem_need = (2 * tm * tk * itemsize
                 + 2 * 8 * tk * itemsize
                 + 2 * tm * 128 * 4
                 + (2 << 20))
    vmem_limit = int(min(max(vmem_need, 32 << 20), int(0.85 * vmem_cap)))

    cost = pl.CostEstimate(
        flops=2 * N * D,
        transcendentals=0,
        bytes_accessed=N * D * itemsize + N * 4 + D * 4,
    )

    grid_spec = pltpu.PrefetchScalarGridSpec(
        num_scalar_prefetch=0,
        grid=(num_row_tiles, num_k),
        in_specs=[
            pl.BlockSpec(memory_space=pltpu.MemorySpace.SMEM),   # bias (1, 1)
            pl.BlockSpec((tm, tk), lambda i, k: (i, k)),         # X tile
            pl.BlockSpec((1, tk), lambda i, k: (0, k)),          # w (lane-major)
        ],
        out_specs=pl.BlockSpec((tm, 1), lambda i, k: (i, 0)),    # y column tile
    )

    y2 = pl.pallas_call(
        _make_matvec_kernel(D, tk, mask_k_tail),
        out_shape=jax.ShapeDtypeStruct((N, 1), jnp.float32),
        grid_spec=grid_spec,
        compiler_params=pltpu.CompilerParams(
            dimension_semantics=("parallel", "arbitrary"),
            vmem_limit_bytes=vmem_limit,
        ),
        cost_estimate=cost,
    )(bias2, X, w2)

    # Trivial elementwise exp: computed in the wrapper (perf review) rather
    # than paying a dedicated custom-call launch + HBM round trip.
    z = jnp.exp(log_z.astype(jnp.float32))

    return y2[:, 0], z


if __name__ == "__main__":
    # Module: PytorchLasso(dim) has bias (1,), w (dim,), log_z (dim,).
    # (The reference __init__ zeroes bias/w; use small deterministic non-zero
    #  values so the mat-vec path is actually exercised.)
    N, dim = 16, 128
    key = jax.random.PRNGKey(0)
    kx, kw, kb, _ = jax.random.split(key, 4)

    X = jax.random.normal(kx, (N, dim), dtype=jnp.float32)
    w = 0.1 * jax.random.normal(kw, (dim,), dtype=jnp.float32)
    bias = 0.1 * jax.random.normal(kb, (1,), dtype=jnp.float32)[0]
    log_z = jnp.ones((dim,), dtype=jnp.float32)   # matches torch.ones(dim)

    y, z = pytorch_lasso_forward(X, w, bias, log_z)
    jax.block_until_ready((y, z))

    # Reference semantics: torch.mv(X, w) + bias.expand(N), torch.exp(log_z)
    y_ref = X @ w + bias
    z_ref = jnp.exp(log_z)
    assert y.shape == (N,) and z.shape == (dim,)
    assert jnp.allclose(y, y_ref, atol=1e-5, rtol=1e-5)
    assert jnp.allclose(z, z_ref, atol=1e-6, rtol=1e-6)

    print("KERNEL_OK")
</pallas_src>

<mosaic_0001>
module attributes {stable_mosaic.version = 11 : i64} {
  func.func @kernel(%arg0: i32, %arg1: i32, %arg2: memref<1x1xf32, #tpu.memory_space<smem>>, %arg3: memref<16x128xf32, #tpu.memory_space<vmem>>, %arg4: memref<1x128xf32, #tpu.memory_space<vmem>>, %arg5: memref<16x1xf32, #tpu.memory_space<vmem>>) attributes {dimension_semantics = [#tpu.dimension_semantics<parallel>, #tpu.dimension_semantics<arbitrary>], iteration_bounds = array<i64: 1, 1>, scalar_prefetch = 0 : i64, scratch_operands = 0 : i64, tpu.core_type = #tpu.core_type<tc>, window_params = [{transform_indices = @transform_0, window_bounds = array<i64: 1, 1>}, {transform_indices = @transform_1, window_bounds = array<i64: 16, 128>}, {transform_indices = @transform_2, window_bounds = array<i64: 1, 128>}, {transform_indices = @transform_3, window_bounds = array<i64: 16, 1>}]} {
    %c0_i32 = arith.constant 0 : i32
    %0 = arith.cmpi eq, %arg1, %c0_i32 : i32
    %1 = arith.extui %0 : i1 to i32
    %c0_i32_0 = arith.constant 0 : i32
    %2 = arith.cmpi ne, %1, %c0_i32_0 : i32
    scf.if %2 {
      %cst_8 = arith.constant 0.000000e+00 : f32
      %12 = vector.broadcast %cst_8 : f32 to vector<16x1xf32>
      %c0_9 = arith.constant 0 : index
      %c0_10 = arith.constant 0 : index
      %13 = memref.load %arg2[%c0_9, %c0_10] : memref<1x1xf32, #tpu.memory_space<smem>>
      %14 = vector.broadcast %13 : f32 to vector<16x1xf32>
      %15 = arith.addf %12, %14 : vector<16x1xf32>
      %c0_11 = arith.constant 0 : index
      %c0_12 = arith.constant 0 : index
      %16 = vector.load %arg5[%c0_11, %c0_12] : memref<16x1xf32, #tpu.memory_space<vmem>>, vector<16x1xf32>
      tpu.vector_store %arg5[%c0_11, %c0_12], %15 {strides = array<i32>} : memref<16x1xf32, #tpu.memory_space<vmem>>, vector<16x1xf32>,
    } else {
    }
    %c0 = arith.constant 0 : index
    %c0_1 = arith.constant 0 : index
    %3 = vector.load %arg3[%c0, %c0_1] : memref<16x128xf32, #tpu.memory_space<vmem>>, vector<16x128xf32>
    %c0_2 = arith.constant 0 : index
    %c0_3 = arith.constant 0 : index
    %4 = vector.load %arg4[%c0_2, %c0_3] : memref<1x128xf32, #tpu.memory_space<vmem>>, vector<1x128xf32>
    %5 = vector.broadcast %4 : vector<1x128xf32> to vector<16x128xf32>
    %6 = arith.mulf %3, %5 : vector<16x128xf32>
    %c0_4 = arith.constant 0 : index
    %c0_5 = arith.constant 0 : index
    %7 = vector.load %arg5[%c0_4, %c0_5] : memref<16x1xf32, #tpu.memory_space<vmem>>, vector<16x1xf32>
    %cst = arith.constant dense<0.000000e+00> : vector<16xf32>
    %8 = vector.multi_reduction <add>, %6, %cst [1] : vector<16x128xf32> to vector<16xf32>
    %9 = vector.shape_cast %8 : vector<16xf32> to vector<16x1xf32>
    %10 = arith.addf %7, %9 : vector<16x1xf32>
    %c0_6 = arith.constant 0 : index
    %c0_7 = arith.constant 0 : index
    %11 = vector.load %arg5[%c0_6, %c0_7] : memref<16x1xf32, #tpu.memory_space<vmem>>, vector<16x1xf32>
    tpu.vector_store %arg5[%c0_6, %c0_7], %10 {strides = array<i32>} : memref<16x1xf32, #tpu.memory_space<vmem>>, vector<16x1xf32>,
    return
  }
  func.func @transform_0(%arg0: i32, %arg1: i32) -> (i32, i32) {
    %c0_i32 = arith.constant 0 : i32
    %c0_i32_0 = arith.constant 0 : i32
    %c0_i32_1 = arith.constant 0 : i32
    return %c0_i32, %c0_i32_0 : i32, i32
  }
  func.func @transform_1(%arg0: i32, %arg1: i32) -> (i32, i32) {
    %c0_i32 = arith.constant 0 : i32
    return %arg0, %arg1 : i32, i32
  }
  func.func @transform_2(%arg0: i32, %arg1: i32) -> (i32, i32) {
    %c0_i32 = arith.constant 0 : i32
    %c0_i32_0 = arith.constant 0 : i32
    return %c0_i32, %arg1 : i32, i32
  }
  func.func @transform_3(%arg0: i32, %arg1: i32) -> (i32, i32) {
    %c0_i32 = arith.constant 0 : i32
    %c0_i32_0 = arith.constant 0 : i32
    return %arg0, %c0_i32 : i32, i32
  }
}

</mosaic_0001>

<llo_original>
// kernel: tpu_custom_call.1
$region0: #{tpu_custom_call.1}
  #allocation0 [shape = 'u32[]', space=smem, size = 0x4, offset = 0x4, fixed_abs, tag = 'smem constant byte address 0x4 - core index']
  #allocation1 [shape = 'u32[72,128]{1,0:T(1,128)}', space=vmem, size = 0x9000, scoped, tag = 'internal scratch']
  #allocation2 [shape = 'f32[1,1]{1,0:T(1,128)S(6)}', space=smem, size = 0x200, scoped, tag = 'scoped memory for tpu_custom_call.1']
  %s0 = inlined_call_operand.<no memory space> [shape: f32[1,1], index: 0, kind: input, shape index: {}]
  %s1 = inlined_call_operand.hbm [shape: f32[16,128], index: 1, kind: input, shape index: {}]
  %s2 = inlined_call_operand.vmem [shape: f32[1,128], index: 2, kind: input, shape index: {}]
  %s3 = inlined_call_operand.vmem [shape: f32[16,1], index: 3, kind: output, shape index: {}]
  %s4 = sld [smem:[#allocation0]]
  $region30: #{tpu_custom_call.1} parent=0
    _
  %s6 = ssub.s32 1, %s4
  %s7 = scalar_select 0, %s6, %s4
  %8 = sst [smem:[#allocation2]] %s0
  $region1: #{tpu_custom_call.1} parent=0
    #allocation3 [shape = 'u8[8192]{0}', space=vmem, size = 0x2000, scoped, tag = 'input window, operand 1, single buffered']
    #allocation4 [shape = 's32[1]{0}', space=sflag, size = 0x4, scoped, tag = 'scoped memory for tpu_custom_call.1']
    %9 = vsyncpa [#allocation4], 0
    // Predicated region
    $region2: #{tpu_custom_call.1} parent=1 // pred_check
      _
    $region3: #{tpu_custom_call.1} parent=1 // pred_check_branch
      %11 = sbr.rel (0) target = $region5
    $region4: #{tpu_custom_call.1} parent=1 // pred_region
      _
    $region5: #{tpu_custom_call.1} parent=1 // pred_fallthru
      _
    // Predicated region
    $region6: #{tpu_custom_call.1} parent=1 // pred_check
      _
    $region7: #{tpu_custom_call.1} parent=1 // pred_check_branch
      %13 = sbr.rel (0) target = $region9
    $region8: #{tpu_custom_call.1} parent=1 // pred_region
      %15 = vsyncadd [#allocation4], 0
      %s16 = sshll.u32 %s1, 4
      %s17 = int_to_ptr.hbm [resolvable:$true] %s16
      %s18 = sshll.u32 [#allocation3], 4
      %s19 = int_to_ptr.vmem [resolvable:$true] %s18
      %24 = dma.hbm_to_vmem [thread:$0]  %s17, 256, %s19, [#allocation4], 128, 128, 8
    $region9: #{tpu_custom_call.1} parent=1 // pred_fallthru
      _
    // Predicated region
    $region10: #{tpu_custom_call.1} parent=1 // pred_check
      _
    $region11: #{tpu_custom_call.1} parent=1 // pred_check_branch
      %26 = sbr.rel (0) target = $region13
    $region12: #{tpu_custom_call.1} parent=1 // pred_region
      _
    $region13: #{tpu_custom_call.1} parent=1 // pred_fallthru
      _
    // Predicated region
    $region14: #{tpu_custom_call.1} parent=1 // pred_check
      _
    $region15: #{tpu_custom_call.1} parent=1 // pred_check_branch
      %28 = sbr.rel (0) target = $region17
    $region16: #{tpu_custom_call.1} parent=1 // pred_region
      %30 = dma.done [#allocation4], 256
    $region17: #{tpu_custom_call.1} parent=1 // pred_fallthru
      _
    %p31 = scmp.eq.s32.totalorder 0, 0
    // Predicated region
    $region18: #{tpu_custom_call.1} parent=1 // pred_check
      %p32 = pneg %p31
    $region19: #{tpu_custom_call.1} parent=1 // pred_check_branch
      %34 = sbr.rel (%p32) target = $region21
    $region20: #{tpu_custom_call.1} parent=1 // pred_region
      %s35 = sld [smem:[#allocation2]]
      %v36 = vstv %s35
      %v37 = vadd.f32 %v36, 0.0
      %vm38 = vcmask 7168
      %39 = vst.msk [vmem:[%s3] sm:$0xff] %vm38, %v37
      %40 = vst.msk [vmem:[%s3 + $0x8] sm:$0xff] %vm38, %v37
    $region21: #{tpu_custom_call.1} parent=1 // pred_fallthru
      _
    %v41 = vld [vmem:[#allocation3] sm:$0xff]
    %v42 = vld [vmem:[#allocation3 + $0x8] sm:$0xff]
    %v43 = vld [vmem:[%s2] sm:$0x1]
    %v45 = vperm.slane %v43, 0
    %v47 = vmul.f32 %v41, %v45
    %v48 = vmul.f32 %v42, %v45
    %v49 = vld [vmem:[%s3] sm:$0xff]
    %v50 = vld [vmem:[%s3 + $0x8] sm:$0xff]
    %51 = vadd.xlane.f32.xlu0 %v47
    %v52 = vpop.xlane.xlu0 %51
    %53 = vadd.xlane.f32.xlu0 %v48
    %v54 = vpop.xlane.xlu0 %53
    %v55 = vadd.f32 %v49, %v52
    %v56 = vadd.f32 %v50, %v54
    %vm57 = vcmask 7168
    %58 = vst.msk [vmem:[%s3] sm:$0xff] %vm57, %v55
    %59 = vst.msk [vmem:[%s3 + $0x8] sm:$0xff] %vm57, %v56
    // Predicated region
    $region22: #{tpu_custom_call.1} parent=1 // pred_check
      _
    $region23: #{tpu_custom_call.1} parent=1 // pred_check_branch
      %61 = sbr.rel (0) target = $region25
    $region24: #{tpu_custom_call.1} parent=1 // pred_region
      _
    $region25: #{tpu_custom_call.1} parent=1 // pred_fallthru
      _
    // Predicated region
    $region26: #{tpu_custom_call.1} parent=1 // pred_check
      _
    $region27: #{tpu_custom_call.1} parent=1 // pred_check_branch
      %63 = sbr.rel (0) target = $region29
    $region28: #{tpu_custom_call.1} parent=1 // pred_region
      _
    $region29: #{tpu_custom_call.1} parent=1 // pred_fallthru
      _
    %64 = vsyncpa [#allocation4], 1

</llo_original>
